<compile_context>
chip_gen: v7x
topology: tpu7x:2x2x1
jax: 0.10.0
libtpu: 0.0.40
codegen_flags: <defaults>
</compile_context>

<pallas_src>
import math

import jax
import jax.numpy as jnp
from jax.experimental import pallas as pl
from jax.experimental.pallas import tpu as pltpu


def _centroids_flow_kernel(e_ref, ct_ref, cen_sq_ref, score_ref):
    """One row-tile of nearest-centroid distances.

    e_ref      : (TM, D) f32  -- embeds rows (natural layout, no HBM transpose)
    ct_ref     : (D, C)  f32  -- centroids^T (tiny, reused every grid step)
    cen_sq_ref : (1, C)  f32  -- precomputed ||c||^2 (hoisted to wrapper)
    score_ref  : (TM, 1) f32  -- min_c sqrt(||e - c||^2)
    """
    e = e_ref[...]
    c_t = ct_ref[...]
    cen_sq = cen_sq_ref[...]

    # 2 * (e . c) on the MXU in standard orientation: (TM, D) x (D, C) -> (TM, C).
    f_c = 2.0 * jnp.dot(e, c_t, preferred_element_type=jnp.float32)
    feat_sq = jnp.sum(e * e, axis=1, keepdims=True)            # (TM, 1)
    d2 = feat_sq + cen_sq - f_c                                 # (TM, C)

    # topk(K+J=1, largest=False) == min over centroids (lane reduce over C);
    # sqrt applied only to the reduced vector (monotonic => exact).  The clamp
    # guards against fp cancellation driving d2 slightly negative (would be NaN
    # in the torch original) -- one VPU op, strictly safer.
    min_d2 = jnp.min(d2, axis=1, keepdims=True)                 # (TM, 1)
    score_ref[...] = jnp.sqrt(jnp.maximum(min_d2, 0.0))


def _pick_row_tile(m, d, c):
    """Row-tile size: 128-multiple near 1024 rows, bounded by a small per-block
    VMEM budget (double-buffered (TM,D) input + (TM,C) intermediate + output).
    Safe on v5e (16 MiB scoped default) and v7x (32 MiB scoped / 64 MiB)."""
    per_row_bytes = 4 * (2 * d + c + 2)
    cap = max(128, ((4 << 20) // per_row_bytes) // 128 * 128)
    tm = min(1024, cap)
    if m <= tm:
        return m          # small problem: a single exact-sized step covers it
    return tm


def centroids_flow_ad_forward(embeds, centroids, r, *, nu=1e-3, K=1, J=0, training=True):
    """Pallas implementation of CentroidsFlowAD.forward.

    embeds:    (B, N, D) float32
    centroids: (C, D)    float32
    r:         (1,)      float32  (soft-boundary radius parameter)
    Returns (loss, score, embeds) with score in NCHW layout: (B, 1, H, W).
    """
    B, N, D = embeds.shape
    C = centroids.shape[0]
    H = int(math.sqrt(N))
    assert H * H == N, "fp_nums must be a perfect square"
    # The module hard-codes K=1, J=0; softmin over a size-1 axis is exactly 1,
    # so sim == nearest-centroid distance and the kernel computes the top-1 min.
    assert K + J == 1, "kernel implements K+J == 1 (top-1 / min) only"

    M = B * N
    TM = _pick_row_tile(M, D, C)
    grid = (pl.cdiv(M, TM),)

    # Wrapper-side prep: NO transpose of embeds (that was a full extra HBM pass);
    # only the tiny centroid tensors are transposed / reduced once.
    e_flat = embeds.reshape(M, D)                                   # (M, D)
    c_t = centroids.T                                               # (D, C)
    cen_sq = jnp.sum(centroids * centroids, axis=1)[None, :]        # (1, C)

    cost = pl.CostEstimate(
        flops=2 * M * D * C + 6 * M * C,
        transcendentals=M,
        bytes_accessed=4 * (M * D + M + D * C + C),
    )

    score_col = pl.pallas_call(
        _centroids_flow_kernel,
        out_shape=jax.ShapeDtypeStruct((M, 1), jnp.float32),
        grid_spec=pltpu.PrefetchScalarGridSpec(
            num_scalar_prefetch=0,
            grid=grid,
            in_specs=[
                pl.BlockSpec((TM, D), lambda i: (i, 0)),   # embeds row tile
                pl.BlockSpec((D, C), lambda i: (0, 0)),    # centroids^T (reused)
                pl.BlockSpec((1, C), lambda i: (0, 0)),    # ||c||^2 (reused)
            ],
            out_specs=pl.BlockSpec((TM, 1), lambda i: (i, 0)),
        ),
        compiler_params=pltpu.CompilerParams(
            dimension_semantics=("parallel",),  # independent tiles -> v7x 2-TC sharding
        ),
        cost_estimate=cost,
    )(e_flat, c_t, cen_sq)

    score = score_col.reshape(B, 1, H, H)   # 'b (h w) c -> b c h w' with c == 1

    if training:
        # dist[:, :, :K] with K=1 is exactly the min distance == kernel output,
        # so the soft-boundary loss is a trivial reduction of the score.
        loss = (1.0 / nu) * jnp.mean(jnp.maximum(score_col - r[0] * r[0], 0.0))
    else:
        loss = jnp.float32(0.0)
    return loss, score, embeds


if __name__ == "__main__":
    # Small shapes consistent with the module:
    #   args.feat_dim = 32, args.fp_nums = 64 (=> 8x8), nmb_protypes = 16, batch = 2
    B, feat_dim, fp_nums, nmb_protypes = 2, 32, 64, 16
    H = int(math.sqrt(fp_nums))

    key = jax.random.PRNGKey(0)
    k1, k2 = jax.random.split(key, 2)
    embeds = jax.random.normal(k1, (B, fp_nums, feat_dim), dtype=jnp.float32)
    centroids = jax.random.normal(k2, (nmb_protypes, feat_dim), dtype=jnp.float32)

    # nn.Parameter: r = 1e-5 * ones(1).  (The Descriptor 1x1 convs exist in
    # __init__ but are not used by forward(), so they are not materialized here.)
    r = jnp.full((1,), 1e-5, dtype=jnp.float32)

    loss, score, embeds_out = centroids_flow_ad_forward(embeds, centroids, r)
    jax.block_until_ready((loss, score, embeds_out))

    # pure-JAX reference for sanity
    feat_ref = jnp.sum(embeds ** 2, axis=2, keepdims=True)               # (B, N, 1)
    cen_ref = jnp.sum(centroids ** 2, axis=1)[None, None, :]             # (1, 1, C)
    f_c_ref = 2.0 * jnp.einsum("bnd,cd->bnc", embeds, centroids)
    dist_ref = jnp.sqrt(feat_ref + cen_ref - f_c_ref)
    min_ref = jnp.min(dist_ref, axis=-1)                                 # (B, N)
    score_ref = min_ref.reshape(B, 1, H, H)
    loss_ref = (1.0 / 1e-3) * jnp.mean(jnp.maximum(min_ref - (1e-5) ** 2, 0.0))

    assert score.shape == (B, 1, H, H)
    assert embeds_out.shape == embeds.shape
    assert jnp.allclose(score, score_ref, atol=5e-3, rtol=1e-3), "score mismatch"
    assert jnp.allclose(loss, loss_ref, atol=5e-2, rtol=1e-3), "loss mismatch"

    print("KERNEL_OK")
</pallas_src>

<mosaic_0001>
module attributes {stable_mosaic.version = 11 : i64} {
  func.func @_centroids_flow_kernel(%arg0: i32, %arg1: memref<128x32xf32, #tpu.memory_space<vmem>>, %arg2: memref<32x16xf32, #tpu.memory_space<vmem>>, %arg3: memref<1x16xf32, #tpu.memory_space<vmem>>, %arg4: memref<128x1xf32, #tpu.memory_space<vmem>>) attributes {dimension_semantics = [#tpu.dimension_semantics<parallel>], iteration_bounds = array<i64: 1>, scalar_prefetch = 0 : i64, scratch_operands = 0 : i64, tpu.core_type = #tpu.core_type<tc>, window_params = [{transform_indices = @transform_0, window_bounds = array<i64: 128, 32>}, {pipeline_mode = #tpu.pipeline_mode<synchronous>, transform_indices = @transform_1, window_bounds = array<i64: 32, 16>}, {pipeline_mode = #tpu.pipeline_mode<synchronous>, transform_indices = @transform_2, window_bounds = array<i64: 1, 16>}, {transform_indices = @transform_3, window_bounds = array<i64: 128, 1>}]} {
    %c0 = arith.constant 0 : index
    %c0_0 = arith.constant 0 : index
    %0 = vector.load %arg1[%c0, %c0_0] : memref<128x32xf32, #tpu.memory_space<vmem>>, vector<128x32xf32>
    %c0_1 = arith.constant 0 : index
    %c0_2 = arith.constant 0 : index
    %1 = vector.load %arg2[%c0_1, %c0_2] : memref<32x16xf32, #tpu.memory_space<vmem>>, vector<32x16xf32>
    %c0_3 = arith.constant 0 : index
    %c0_4 = arith.constant 0 : index
    %2 = vector.load %arg3[%c0_3, %c0_4] : memref<1x16xf32, #tpu.memory_space<vmem>>, vector<1x16xf32>
    %cst = arith.constant dense<0.000000e+00> : vector<128x16xf32>
    %3 = tpu.matmul %0, %1, %cst {dimension_numbers = #tpu.dot_dimension_numbers<[1], [0], [0], [1], [0, 0, 1, 1], [], []>} : vector<128x32xf32>, vector<32x16xf32>, vector<128x16xf32> -> vector<128x16xf32>
    %cst_5 = arith.constant 2.000000e+00 : f32
    %4 = vector.broadcast %cst_5 : f32 to vector<128x16xf32>
    %5 = arith.mulf %4, %3 : vector<128x16xf32>
    %6 = arith.mulf %0, %0 : vector<128x32xf32>
    %cst_6 = arith.constant dense<0.000000e+00> : vector<128xf32>
    %7 = vector.multi_reduction <add>, %6, %cst_6 [1] : vector<128x32xf32> to vector<128xf32>
    %8 = vector.shape_cast %7 : vector<128xf32> to vector<128x1xf32>
    %9 = vector.broadcast %8 : vector<128x1xf32> to vector<128x16xf32>
    %10 = vector.broadcast %2 : vector<1x16xf32> to vector<128x16xf32>
    %11 = arith.addf %9, %10 : vector<128x16xf32>
    %12 = arith.subf %11, %5 : vector<128x16xf32>
    %cst_7 = arith.constant dense<0x7F800000> : vector<128xf32>
    %13 = vector.multi_reduction <minimumf>, %12, %cst_7 [1] : vector<128x16xf32> to vector<128xf32>
    %14 = vector.shape_cast %13 : vector<128xf32> to vector<128x1xf32>
    %cst_8 = arith.constant 0.000000e+00 : f32
    %15 = vector.broadcast %cst_8 : f32 to vector<128x1xf32>
    %16 = arith.maximumf %14, %15 : vector<128x1xf32>
    %17 = math.sqrt %16 : vector<128x1xf32>
    %c0_9 = arith.constant 0 : index
    %c0_10 = arith.constant 0 : index
    %18 = vector.load %arg4[%c0_9, %c0_10] : memref<128x1xf32, #tpu.memory_space<vmem>>, vector<128x1xf32>
    tpu.vector_store %arg4[%c0_9, %c0_10], %17 {strides = array<i32>} : memref<128x1xf32, #tpu.memory_space<vmem>>, vector<128x1xf32>,
    return
  }
  func.func @transform_0(%arg0: i32) -> (i32, i32) {
    %c0_i32 = arith.constant 0 : i32
    %c0_i32_0 = arith.constant 0 : i32
    return %arg0, %c0_i32 : i32, i32
  }
  func.func @transform_1(%arg0: i32) -> (i32, i32) {
    %c0_i32 = arith.constant 0 : i32
    %c0_i32_0 = arith.constant 0 : i32
    %c0_i32_1 = arith.constant 0 : i32
    return %c0_i32, %c0_i32_0 : i32, i32
  }
  func.func @transform_2(%arg0: i32) -> (i32, i32) {
    %c0_i32 = arith.constant 0 : i32
    %c0_i32_0 = arith.constant 0 : i32
    %c0_i32_1 = arith.constant 0 : i32
    return %c0_i32, %c0_i32_0 : i32, i32
  }
  func.func @transform_3(%arg0: i32) -> (i32, i32) {
    %c0_i32 = arith.constant 0 : i32
    %c0_i32_0 = arith.constant 0 : i32
    return %arg0, %c0_i32 : i32, i32
  }
}

</mosaic_0001>

<llo_original>
// kernel: tpu_custom_call.1
$region0: #{tpu_custom_call.1}
  #allocation0 [shape = 'u32[]', space=smem, size = 0x4, offset = 0x4, fixed_abs, tag = 'smem constant byte address 0x4 - core index']
  #allocation1 [shape = 'u32[144,128]{1,0:T(1,128)}', space=vmem, size = 0x12000, scoped, tag = 'internal scratch']
  %s0 = inlined_call_operand.vmem [shape: f32[128,32], index: 0, kind: input, shape index: {}]
  %s1 = inlined_call_operand.vmem [shape: f32[32,16], index: 1, kind: input, shape index: {}]
  %s2 = inlined_call_operand.vmem [shape: f32[1,16], index: 2, kind: input, shape index: {}]
  %s3 = inlined_call_operand.vmem [shape: f32[128,1], index: 3, kind: output, shape index: {}]
  %s4 = sld [smem:[#allocation0]]
  $region22: #{tpu_custom_call.1} parent=0
    _
  %s6 = ssub.s32 1, %s4
  %s7 = scalar_select 0, %s6, %s4
  // Predicated region
  $region2: #{tpu_custom_call.1} parent=0 // pred_check
    _
  $region3: #{tpu_custom_call.1} parent=0 // pred_check_branch
    %9 = sbr.rel (0) target = $region5
  $region4: #{tpu_custom_call.1} parent=0 // pred_region
    _
  $region5: #{tpu_custom_call.1} parent=0 // pred_fallthru
    _
  // Predicated region
  $region6: #{tpu_custom_call.1} parent=0 // pred_check
    _
  $region7: #{tpu_custom_call.1} parent=0 // pred_check_branch
    %11 = sbr.rel (0) target = $region9
  $region8: #{tpu_custom_call.1} parent=0 // pred_region
    _
  $region9: #{tpu_custom_call.1} parent=0 // pred_fallthru
    _
  // Predicated region
  $region10: #{tpu_custom_call.1} parent=0 // pred_check
    _
  $region11: #{tpu_custom_call.1} parent=0 // pred_check_branch
    %13 = sbr.rel (0) target = $region13
  $region12: #{tpu_custom_call.1} parent=0 // pred_region
    _
  $region13: #{tpu_custom_call.1} parent=0 // pred_fallthru
    _
  %v14 = vld [vmem:[%s0] sm:$0xff]
  %v15 = vld [vmem:[%s0 + $0x8] sm:$0xff]
  %v16 = vld [vmem:[%s0 + $0x10] sm:$0xff]
  %v17 = vld [vmem:[%s0 + $0x18] sm:$0xff]
  %v18 = vld [vmem:[%s0 + $0x20] sm:$0xff]
  %v19 = vld [vmem:[%s0 + $0x28] sm:$0xff]
  %v20 = vld [vmem:[%s0 + $0x30] sm:$0xff]
  %v21 = vld [vmem:[%s0 + $0x38] sm:$0xff]
  %v22 = vld [vmem:[%s0 + $0x40] sm:$0xff]
  %v23 = vld [vmem:[%s0 + $0x48] sm:$0xff]
  %v24 = vld [vmem:[%s0 + $0x50] sm:$0xff]
  %v25 = vld [vmem:[%s0 + $0x58] sm:$0xff]
  %v26 = vld [vmem:[%s0 + $0x60] sm:$0xff]
  %v27 = vld [vmem:[%s0 + $0x68] sm:$0xff]
  %v28 = vld [vmem:[%s0 + $0x70] sm:$0xff]
  %v29 = vld [vmem:[%s0 + $0x78] sm:$0xff]
  %v30 = vld [vmem:[%s1] sm:$0xff]
  %v31 = vld [vmem:[%s1 + $0x8] sm:$0xff]
  %v32 = vld [vmem:[%s1 + $0x10] sm:$0xff]
  %v33 = vld [vmem:[%s1 + $0x18] sm:$0xff]
  %v34 = vld [vmem:[%s2] sm:$0x1]
  %vm35 = vcmask 261120
  %v37 = vsel %vm35, %v14, 0
  %v40 = vsel %vm35, %v15, 0
  %v43 = vsel %vm35, %v16, 0
  %v46 = vsel %vm35, %v17, 0
  %v49 = vsel %vm35, %v18, 0
  %v52 = vsel %vm35, %v19, 0
  %v55 = vsel %vm35, %v20, 0
  %v58 = vsel %vm35, %v21, 0
  %v61 = vsel %vm35, %v22, 0
  %v64 = vsel %vm35, %v23, 0
  %v67 = vsel %vm35, %v24, 0
  %v70 = vsel %vm35, %v25, 0
  %v73 = vsel %vm35, %v26, 0
  %v76 = vsel %vm35, %v27, 0
  %v79 = vsel %vm35, %v28, 0
  %v82 = vsel %vm35, %v29, 0
  %84 = vmatprep.subr.mxu0 0.0
  %85 = vmatpush1.msra.mxu0 %v30
  %86 = vmatprep.subr.mxu0 0.0
  %87 = vmatpush1.msra.mxu0 %v31
  %88 = vmatprep.subr.mxu0 0.0
  %89 = vmatpush1.msra.mxu0 %v32
  %90 = vmatprep.subr.mxu0 0.0
  %91 = vmatpush1.msra.mxu0 %v33
  %92 = vmatprep.subr.mxu0 0.0
  %93 = vmatpush1.msra.mxu0 0.0
  %94 = vmatprep.subr.mxu0 0.0
  %95 = vmatpush1.msra.mxu0 0.0
  %96 = vmatprep.subr.mxu0 0.0
  %97 = vmatpush1.msra.mxu0 0.0
  %98 = vmatprep.subr.mxu0 0.0
  %99 = vmatpush1.msra.mxu0 0.0
  %100 = vmatprep.subr.mxu0 0.0
  %101 = vmatpush1.msra.mxu0 0.0
  %102 = vmatprep.subr.mxu0 0.0
  %103 = vmatpush1.msra.mxu0 0.0
  %104 = vmatprep.subr.mxu0 0.0
  %105 = vmatpush1.msra.mxu0 0.0
  %106 = vmatprep.subr.mxu0 0.0
  %107 = vmatpush1.msra.mxu0 0.0
  %108 = vmatprep.subr.mxu0 0.0
  %109 = vmatpush1.msra.mxu0 0.0
  %110 = vmatprep.subr.mxu0 0.0
  %111 = vmatpush1.msra.mxu0 0.0
  %112 = vmatprep.subr.mxu0 0.0
  %113 = vmatpush1.msra.mxu0 0.0
  %114 = vmatprep.subr.mxu0 0.0
  %115 = vmatpush1.msra.mxu0 0.0
  %116 = vmatprep.subr.mxu0 0.0
  %117 = vmatpush1.msra.mxu0 0.0
  %118 = vmatprep.subr.mxu0 0.0
  %119 = vmatpush1.msra.mxu0 0.0
  %120 = vmatprep.subr.mxu0 0.0
  %121 = vmatpush1.msra.mxu0 0.0
  %122 = vmatprep.subr.mxu0 0.0
  %123 = vmatpush1.msra.mxu0 0.0
  %124 = vmatprep.subr.mxu0 0.0
  %125 = vmatpush1.msra.mxu0 0.0
  %126 = vmatprep.subr.mxu0 0.0
  %127 = vmatpush1.msra.mxu0 0.0
  %128 = vmatprep.subr.mxu0 0.0
  %129 = vmatpush1.msra.mxu0 0.0
  %130 = vmatprep.subr.mxu0 0.0
  %131 = vmatpush1.msra.mxu0 0.0
  %132 = vmatprep.subr.mxu0 0.0
  %133 = vmatpush1.msra.mxu0 0.0
  %134 = vmatprep.subr.mxu0 0.0
  %135 = vmatpush1.msra.mxu0 0.0
  %136 = vmatprep.subr.mxu0 0.0
  %137 = vmatpush1.msra.mxu0 0.0
  %138 = vmatprep.subr.mxu0 0.0
  %139 = vmatpush1.msra.mxu0 0.0
  %140 = vmatprep.subr.mxu0 0.0
  %141 = vmatpush1.msra.mxu0 0.0
  %142 = vmatprep.subr.mxu0 0.0
  %143 = vmatpush1.msra.mxu0 0.0
  %144 = vmatprep.subr.mxu0 0.0
  %145 = vmatpush1.msra.mxu0 0.0
  %146 = vmatprep.subr.mxu0 0.0
  %147 = vmatpush1.msra.mxu0 0.0
  %148 = vmatprep.mubr.f32.mxu0 0.0
  %149 = vmatmul.mubr.f32.gmra.mrb[0].mxu0 %v37
  %v150 = vpop.f32.mrb[0].mxu0
  %v151 = vadd.f32 0.0, %v150
  %v152 = vpop.f32.mrb[0].mxu0
  %153 = vmatprep.mubr.f32.mxu0 0.0
  %154 = vmatmul.mubr.f32.gmra.mrb[0].mxu0 %v40
  %v155 = vpop.f32.mrb[0].mxu0
  %v156 = vadd.f32 0.0, %v155
  %v157 = vpop.f32.mrb[0].mxu0
  %158 = vmatprep.mubr.f32.mxu0 0.0
  %159 = vmatmul.mubr.f32.gmra.mrb[0].mxu0 %v43
  %v160 = vpop.f32.mrb[0].mxu0
  %v161 = vadd.f32 0.0, %v160
  %v162 = vpop.f32.mrb[0].mxu0
  %163 = vmatprep.mubr.f32.mxu0 0.0
  %164 = vmatmul.mubr.f32.gmra.mrb[0].mxu0 %v46
  %v165 = vpop.f32.mrb[0].mxu0
  %v166 = vadd.f32 0.0, %v165
  %v167 = vpop.f32.mrb[0].mxu0
  %168 = vmatprep.mubr.f32.mxu0 0.0
  %169 = vmatmul.mubr.f32.gmra.mrb[0].mxu0 %v49
  %v170 = vpop.f32.mrb[0].mxu0
  %v171 = vadd.f32 0.0, %v170
  %v172 = vpop.f32.mrb[0].mxu0
  %173 = vmatprep.mubr.f32.mxu0 0.0
  %174 = vmatmul.mubr.f32.gmra.mrb[0].mxu0 %v52
  %v175 = vpop.f32.mrb[0].mxu0
  %v176 = vadd.f32 0.0, %v175
  %v177 = vpop.f32.mrb[0].mxu0
  %178 = vmatprep.mubr.f32.mxu0 0.0
  %179 = vmatmul.mubr.f32.gmra.mrb[0].mxu0 %v55
  %v180 = vpop.f32.mrb[0].mxu0
  %v181 = vadd.f32 0.0, %v180
  %v182 = vpop.f32.mrb[0].mxu0
  %183 = vmatprep.mubr.f32.mxu0 0.0
  %184 = vmatmul.mubr.f32.gmra.mrb[0].mxu0 %v58
  %v185 = vpop.f32.mrb[0].mxu0
  %v186 = vadd.f32 0.0, %v185
  %v187 = vpop.f32.mrb[0].mxu0
  %188 = vmatprep.mubr.f32.mxu0 0.0
  %189 = vmatmul.mubr.f32.gmra.mrb[0].mxu0 %v61
  %v190 = vpop.f32.mrb[0].mxu0
  %v191 = vadd.f32 0.0, %v190
  %v192 = vpop.f32.mrb[0].mxu0
  %193 = vmatprep.mubr.f32.mxu0 0.0
  %194 = vmatmul.mubr.f32.gmra.mrb[0].mxu0 %v64
  %v195 = vpop.f32.mrb[0].mxu0
  %v196 = vadd.f32 0.0, %v195
  %v197 = vpop.f32.mrb[0].mxu0
  %198 = vmatprep.mubr.f32.mxu0 0.0
  %199 = vmatmul.mubr.f32.gmra.mrb[0].mxu0 %v67
  %v200 = vpop.f32.mrb[0].mxu0
  %v201 = vadd.f32 0.0, %v200
  %v202 = vpop.f32.mrb[0].mxu0
  %203 = vmatprep.mubr.f32.mxu0 0.0
  %204 = vmatmul.mubr.f32.gmra.mrb[0].mxu0 %v70
  %v205 = vpop.f32.mrb[0].mxu0
  %v206 = vadd.f32 0.0, %v205
  %v207 = vpop.f32.mrb[0].mxu0
  %208 = vmatprep.mubr.f32.mxu0 0.0
  %209 = vmatmul.mubr.f32.gmra.mrb[0].mxu0 %v73
  %v210 = vpop.f32.mrb[0].mxu0
  %v211 = vadd.f32 0.0, %v210
  %v212 = vpop.f32.mrb[0].mxu0
  %213 = vmatprep.mubr.f32.mxu0 0.0
  %214 = vmatmul.mubr.f32.gmra.mrb[0].mxu0 %v76
  %v215 = vpop.f32.mrb[0].mxu0
  %v216 = vadd.f32 0.0, %v215
  %v217 = vpop.f32.mrb[0].mxu0
  %218 = vmatprep.mubr.f32.mxu0 0.0
  %219 = vmatmul.mubr.f32.gmra.mrb[0].mxu0 %v79
  %v220 = vpop.f32.mrb[0].mxu0
  %v221 = vadd.f32 0.0, %v220
  %v222 = vpop.f32.mrb[0].mxu0
  %223 = vmatprep.mubr.f32.mxu0 0.0
  %224 = vmatmul.mubr.f32.gmra.mrb[0].mxu0 %v82
  %v225 = vpop.f32.mrb[0].mxu0
  %v226 = vadd.f32 0.0, %v225
  %v227 = vpop.f32.mrb[0].mxu0
  %228 = vdwg.mxu0
  %v229 = vmul.f32 %v151, 2.0
  %v230 = vmul.f32 %v156, 2.0
  %v231 = vmul.f32 %v161, 2.0
  %v232 = vmul.f32 %v166, 2.0
  %v233 = vmul.f32 %v171, 2.0
  %v234 = vmul.f32 %v176, 2.0
  %v235 = vmul.f32 %v181, 2.0
  %v236 = vmul.f32 %v186, 2.0
  %v237 = vmul.f32 %v191, 2.0
  %v238 = vmul.f32 %v196, 2.0
  %v239 = vmul.f32 %v201, 2.0
  %v240 = vmul.f32 %v206, 2.0
  %v241 = vmul.f32 %v211, 2.0
  %v242 = vmul.f32 %v216, 2.0
  %v243 = vmul.f32 %v221, 2.0
  %v244 = vmul.f32 %v226, 2.0
  %v245 = vmul.f32 %v14, %v14
  %v246 = vmul.f32 %v15, %v15
  %v247 = vmul.f32 %v16, %v16
  %v248 = vmul.f32 %v17, %v17
  %v249 = vmul.f32 %v18, %v18
  %v250 = vmul.f32 %v19, %v19
  %v251 = vmul.f32 %v20, %v20
  %v252 = vmul.f32 %v21, %v21
  %v253 = vmul.f32 %v22, %v22
  %v254 = vmul.f32 %v23, %v23
  %v255 = vmul.f32 %v24, %v24
  %v256 = vmul.f32 %v25, %v25
  %v257 = vmul.f32 %v26, %v26
  %v258 = vmul.f32 %v27, %v27
  %v259 = vmul.f32 %v28, %v28
  %v260 = vmul.f32 %v29, %v29
  %v261 = vsel %vm35, %v245, 0.0
  %262 = vadd.xlane.f32.xlu0 %v261
  %v263 = vpop.xlane.xlu0 %262
  %v264 = vsel %vm35, %v246, 0.0
  %265 = vadd.xlane.f32.xlu0 %v264
  %v266 = vpop.xlane.xlu0 %265
  %v267 = vsel %vm35, %v247, 0.0
  %268 = vadd.xlane.f32.xlu0 %v267
  %v269 = vpop.xlane.xlu0 %268
  %v270 = vsel %vm35, %v248, 0.0
  %271 = vadd.xlane.f32.xlu0 %v270
  %v272 = vpop.xlane.xlu0 %271
  %v273 = vsel %vm35, %v249, 0.0
  %274 = vadd.xlane.f32.xlu0 %v273
  %v275 = vpop.xlane.xlu0 %274
  %v276 = vsel %vm35, %v250, 0.0
  %277 = vadd.xlane.f32.xlu0 %v276
  %v278 = vpop.xlane.xlu0 %277
  %v279 = vsel %vm35, %v251, 0.0
  %280 = vadd.xlane.f32.xlu0 %v279
  %v281 = vpop.xlane.xlu0 %280
  %v282 = vsel %vm35, %v252, 0.0
  %283 = vadd.xlane.f32.xlu0 %v282
  %v284 = vpop.xlane.xlu0 %283
  %v285 = vsel %vm35, %v253, 0.0
  %286 = vadd.xlane.f32.xlu0 %v285
  %v287 = vpop.xlane.xlu0 %286
  %v288 = vsel %vm35, %v254, 0.0
  %289 = vadd.xlane.f32.xlu0 %v288
  %v290 = vpop.xlane.xlu0 %289
  %v291 = vsel %vm35, %v255, 0.0
  %292 = vadd.xlane.f32.xlu0 %v291
  %v293 = vpop.xlane.xlu0 %292
  %v294 = vsel %vm35, %v256, 0.0
  %295 = vadd.xlane.f32.xlu0 %v294
  %v296 = vpop.xlane.xlu0 %295
  %v297 = vsel %vm35, %v257, 0.0
  %298 = vadd.xlane.f32.xlu0 %v297
  %v299 = vpop.xlane.xlu0 %298
  %v300 = vsel %vm35, %v258, 0.0
  %301 = vadd.xlane.f32.xlu0 %v300
  %v302 = vpop.xlane.xlu0 %301
  %v303 = vsel %vm35, %v259, 0.0
  %304 = vadd.xlane.f32.xlu0 %v303
  %v305 = vpop.xlane.xlu0 %304
  %v306 = vsel %vm35, %v260, 0.0
  %307 = vadd.xlane.f32.xlu0 %v306
  %v308 = vpop.xlane.xlu0 %307
  %v310 = vlaneseq
  %v311 = vshrl.u32 %v310, 7
  %v312 = vsub.s32 0, %v311
  %v313 = vrot.slane %v34, %v312
  %v315 = vadd.f32 %v263, %v313
  %v316 = vadd.f32 %v266, %v313
  %v317 = vadd.f32 %v269, %v313
  %v318 = vadd.f32 %v272, %v313
  %v319 = vadd.f32 %v275, %v313
  %v320 = vadd.f32 %v278, %v313
  %v321 = vadd.f32 %v281, %v313
  %v322 = vadd.f32 %v284, %v313
  %v323 = vadd.f32 %v287, %v313
  %v324 = vadd.f32 %v290, %v313
  %v325 = vadd.f32 %v293, %v313
  %v326 = vadd.f32 %v296, %v313
  %v327 = vadd.f32 %v299, %v313
  %v328 = vadd.f32 %v302, %v313
  %v329 = vadd.f32 %v305, %v313
  %v330 = vadd.f32 %v308, %v313
  %v331 = vsub.f32 %v315, %v229
  %v332 = vsub.f32 %v316, %v230
  %v333 = vsub.f32 %v317, %v231
  %v334 = vsub.f32 %v318, %v232
  %v335 = vsub.f32 %v319, %v233
  %v336 = vsub.f32 %v320, %v234
  %v337 = vsub.f32 %v321, %v235
  %v338 = vsub.f32 %v322, %v236
  %v339 = vsub.f32 %v323, %v237
  %v340 = vsub.f32 %v324, %v238
  %v341 = vsub.f32 %v325, %v239
  %v342 = vsub.f32 %v326, %v240
  %v343 = vsub.f32 %v327, %v241
  %v344 = vsub.f32 %v328, %v242
  %v345 = vsub.f32 %v329, %v243
  %v346 = vsub.f32 %v330, %v244
  %vm347 = vcmask 130048
  %v348 = vsel %vm347, %v331, inf
  %349 = vmin.xlane.f32.xlu0 %v348
  %v350 = vpop.xlane.xlu0 %349
  %v351 = vsel %vm347, %v332, inf
  %352 = vmin.xlane.f32.xlu0 %v351
  %v353 = vpop.xlane.xlu0 %352
  %v354 = vsel %vm347, %v333, inf
  %355 = vmin.xlane.f32.xlu0 %v354
  %v356 = vpop.xlane.xlu0 %355
  %v357 = vsel %vm347, %v334, inf
  %358 = vmin.xlane.f32.xlu0 %v357
  %v359 = vpop.xlane.xlu0 %358
  %v360 = vsel %vm347, %v335, inf
  %361 = vmin.xlane.f32.xlu0 %v360
  %v362 = vpop.xlane.xlu0 %361
  %v363 = vsel %vm347, %v336, inf
  %364 = vmin.xlane.f32.xlu0 %v363
  %v365 = vpop.xlane.xlu0 %364
  %v366 = vsel %vm347, %v337, inf
  %367 = vmin.xlane.f32.xlu0 %v366
  %v368 = vpop.xlane.xlu0 %367
  %v369 = vsel %vm347, %v338, inf
  %370 = vmin.xlane.f32.xlu0 %v369
  %v371 = vpop.xlane.xlu0 %370
  %v372 = vsel %vm347, %v339, inf
  %373 = vmin.xlane.f32.xlu0 %v372
  %v374 = vpop.xlane.xlu0 %373
  %v375 = vsel %vm347, %v340, inf
  %376 = vmin.xlane.f32.xlu0 %v375
  %v377 = vpop.xlane.xlu0 %376
  %v378 = vsel %vm347, %v341, inf
  %379 = vmin.xlane.f32.xlu0 %v378
  %v380 = vpop.xlane.xlu0 %379
  %v381 = vsel %vm347, %v342, inf
  %382 = vmin.xlane.f32.xlu0 %v381
  %v383 = vpop.xlane.xlu0 %382
  %v384 = vsel %vm347, %v343, inf
  %385 = vmin.xlane.f32.xlu0 %v384
  %v386 = vpop.xlane.xlu0 %385
  %v387 = vsel %vm347, %v344, inf
  %388 = vmin.xlane.f32.xlu0 %v387
  %v389 = vpop.xlane.xlu0 %388
  %v390 = vsel %vm347, %v345, inf
  %391 = vmin.xlane.f32.xlu0 %v390
  %v392 = vpop.xlane.xlu0 %391
  %v393 = vsel %vm347, %v346, inf
  %394 = vmin.xlane.f32.xlu0 %v393
  %v395 = vpop.xlane.xlu0 %394
  %v396 = vmax.f32 %v350, 0.0
  %v397 = vmax.f32 %v353, 0.0
  %v398 = vmax.f32 %v356, 0.0
  %v399 = vmax.f32 %v359, 0.0
  %v400 = vmax.f32 %v362, 0.0
  %v401 = vmax.f32 %v365, 0.0
  %v402 = vmax.f32 %v368, 0.0
  %v403 = vmax.f32 %v371, 0.0
  %v404 = vmax.f32 %v374, 0.0
  %v405 = vmax.f32 %v377, 0.0
  %v406 = vmax.f32 %v380, 0.0
  %v407 = vmax.f32 %v383, 0.0
  %v408 = vmax.f32 %v386, 0.0
  %v409 = vmax.f32 %v389, 0.0
  %v410 = vmax.f32 %v392, 0.0
  %v411 = vmax.f32 %v395, 0.0
  %v412 = vrsqrt.pop %v396
  %v413 = vmul.f32 %v396, %v412
  %vm414 = vcmp.eq.f32.partialorder %v396, inf
  %v415 = vsel %vm414, %v396, %v413
  %vm416 = vcmp.eq.f32.partialorder %v396, 0.0
  %v417 = vand.u32 %v396, 2147483648
  %v418 = vsel %vm416, %v417, %v415
  %v419 = vrsqrt.pop %v397
  %v420 = vmul.f32 %v397, %v419
  %vm421 = vcmp.eq.f32.partialorder %v397, inf
  %v422 = vsel %vm421, %v397, %v420
  %vm423 = vcmp.eq.f32.partialorder %v397, 0.0
  %v424 = vand.u32 %v397, 2147483648
  %v425 = vsel %vm423, %v424, %v422
  %v426 = vrsqrt.pop %v398
  %v427 = vmul.f32 %v398, %v426
  %vm428 = vcmp.eq.f32.partialorder %v398, inf
  %v429 = vsel %vm428, %v398, %v427
  %vm430 = vcmp.eq.f32.partialorder %v398, 0.0
  %v431 = vand.u32 %v398, 2147483648
  %v432 = vsel %vm430, %v431, %v429
  %v433 = vrsqrt.pop %v399
  %v434 = vmul.f32 %v399, %v433
  %vm435 = vcmp.eq.f32.partialorder %v399, inf
  %v436 = vsel %vm435, %v399, %v434
  %vm437 = vcmp.eq.f32.partialorder %v399, 0.0
  %v438 = vand.u32 %v399, 2147483648
  %v439 = vsel %vm437, %v438, %v436
  %v440 = vrsqrt.pop %v400
  %v441 = vmul.f32 %v400, %v440
  %vm442 = vcmp.eq.f32.partialorder %v400, inf
  %v443 = vsel %vm442, %v400, %v441
  %vm444 = vcmp.eq.f32.partialorder %v400, 0.0
  %v445 = vand.u32 %v400, 2147483648
  %v446 = vsel %vm444, %v445, %v443
  %v447 = vrsqrt.pop %v401
  %v448 = vmul.f32 %v401, %v447
  %vm449 = vcmp.eq.f32.partialorder %v401, inf
  %v450 = vsel %vm449, %v401, %v448
  %vm451 = vcmp.eq.f32.partialorder %v401, 0.0
  %v452 = vand.u32 %v401, 2147483648
  %v453 = vsel %vm451, %v452, %v450
  %v454 = vrsqrt.pop %v402
  %v455 = vmul.f32 %v402, %v454
  %vm456 = vcmp.eq.f32.partialorder %v402, inf
  %v457 = vsel %vm456, %v402, %v455
  %vm458 = vcmp.eq.f32.partialorder %v402, 0.0
  %v459 = vand.u32 %v402, 2147483648
  %v460 = vsel %vm458, %v459, %v457
  %v461 = vrsqrt.pop %v403
  %v462 = vmul.f32 %v403, %v461
  %vm463 = vcmp.eq.f32.partialorder %v403, inf
  %v464 = vsel %vm463, %v403, %v462
  %vm465 = vcmp.eq.f32.partialorder %v403, 0.0
  %v466 = vand.u32 %v403, 2147483648
  %v467 = vsel %vm465, %v466, %v464
  %v468 = vrsqrt.pop %v404
  %v469 = vmul.f32 %v404, %v468
  %vm470 = vcmp.eq.f32.partialorder %v404, inf
  %v471 = vsel %vm470, %v404, %v469
  %vm472 = vcmp.eq.f32.partialorder %v404, 0.0
  %v473 = vand.u32 %v404, 2147483648
  %v474 = vsel %vm472, %v473, %v471
  %v475 = vrsqrt.pop %v405
  %v476 = vmul.f32 %v405, %v475
  %vm477 = vcmp.eq.f32.partialorder %v405, inf
  %v478 = vsel %vm477, %v405, %v476
  %vm479 = vcmp.eq.f32.partialorder %v405, 0.0
  %v480 = vand.u32 %v405, 2147483648
  %v481 = vsel %vm479, %v480, %v478
  %v482 = vrsqrt.pop %v406
  %v483 = vmul.f32 %v406, %v482
  %vm484 = vcmp.eq.f32.partialorder %v406, inf
  %v485 = vsel %vm484, %v406, %v483
  %vm486 = vcmp.eq.f32.partialorder %v406, 0.0
  %v487 = vand.u32 %v406, 2147483648
  %v488 = vsel %vm486, %v487, %v485
  %v489 = vrsqrt.pop %v407
  %v490 = vmul.f32 %v407, %v489
  %vm491 = vcmp.eq.f32.partialorder %v407, inf
  %v492 = vsel %vm491, %v407, %v490
  %vm493 = vcmp.eq.f32.partialorder %v407, 0.0
  %v494 = vand.u32 %v407, 2147483648
  %v495 = vsel %vm493, %v494, %v492
  %v496 = vrsqrt.pop %v408
  %v497 = vmul.f32 %v408, %v496
  %vm498 = vcmp.eq.f32.partialorder %v408, inf
  %v499 = vsel %vm498, %v408, %v497
  %vm500 = vcmp.eq.f32.partialorder %v408, 0.0
  %v501 = vand.u32 %v408, 2147483648
  %v502 = vsel %vm500, %v501, %v499
  %v503 = vrsqrt.pop %v409
  %v504 = vmul.f32 %v409, %v503
  %vm505 = vcmp.eq.f32.partialorder %v409, inf
  %v506 = vsel %vm505, %v409, %v504
  %vm507 = vcmp.eq.f32.partialorder %v409, 0.0
  %v508 = vand.u32 %v409, 2147483648
  %v509 = vsel %vm507, %v508, %v506
  %v510 = vrsqrt.pop %v410
  %v511 = vmul.f32 %v410, %v510
  %vm512 = vcmp.eq.f32.partialorder %v410, inf
  %v513 = vsel %vm512, %v410, %v511
  %vm514 = vcmp.eq.f32.partialorder %v410, 0.0
  %v515 = vand.u32 %v410, 2147483648
  %v516 = vsel %vm514, %v515, %v513
  %v517 = vrsqrt.pop %v411
  %v518 = vmul.f32 %v411, %v517
  %vm519 = vcmp.eq.f32.partialorder %v411, inf
  %v520 = vsel %vm519, %v411, %v518
  %vm521 = vcmp.eq.f32.partialorder %v411, 0.0
  %v522 = vand.u32 %v411, 2147483648
  %v523 = vsel %vm521, %v522, %v520
  %vm524 = vcmask 7168
  %525 = vst.msk [vmem:[%s3] sm:$0xff] %vm524, %v418
  %526 = vst.msk [vmem:[%s3 + $0x8] sm:$0xff] %vm524, %v425
  %527 = vst.msk [vmem:[%s3 + $0x10] sm:$0xff] %vm524, %v432
  %528 = vst.msk [vmem:[%s3 + $0x18] sm:$0xff] %vm524, %v439
  %529 = vst.msk [vmem:[%s3 + $0x20] sm:$0xff] %vm524, %v446
  %530 = vst.msk [vmem:[%s3 + $0x28] sm:$0xff] %vm524, %v453
  %531 = vst.msk [vmem:[%s3 + $0x30] sm:$0xff] %vm524, %v460
  %532 = vst.msk [vmem:[%s3 + $0x38] sm:$0xff] %vm524, %v467
  %533 = vst.msk [vmem:[%s3 + $0x40] sm:$0xff] %vm524, %v474
  %534 = vst.msk [vmem:[%s3 + $0x48] sm:$0xff] %vm524, %v481
  %535 = vst.msk [vmem:[%s3 + $0x50] sm:$0xff] %vm524, %v488
  %536 = vst.msk [vmem:[%s3 + $0x58] sm:$0xff] %vm524, %v495
  %537 = vst.msk [vmem:[%s3 + $0x60] sm:$0xff] %vm524, %v502
  %538 = vst.msk [vmem:[%s3 + $0x68] sm:$0xff] %vm524, %v509
  %539 = vst.msk [vmem:[%s3 + $0x70] sm:$0xff] %vm524, %v516
  %540 = vst.msk [vmem:[%s3 + $0x78] sm:$0xff] %vm524, %v523
  // Predicated region
  $region14: #{tpu_custom_call.1} parent=0 // pred_check
    _
  $region15: #{tpu_custom_call.1} parent=0 // pred_check_branch
    %542 = sbr.rel (0) target = $region17
  $region16: #{tpu_custom_call.1} parent=0 // pred_region
    _
  $region17: #{tpu_custom_call.1} parent=0 // pred_fallthru
    _
  // Predicated region
  $region18: #{tpu_custom_call.1} parent=0 // pred_check
    _
  $region19: #{tpu_custom_call.1} parent=0 // pred_check_branch
    %544 = sbr.rel (0) target = $region21
  $region20: #{tpu_custom_call.1} parent=0 // pred_region
    _
  $region21: #{tpu_custom_call.1} parent=0 // pred_fallthru
    _

</llo_original>
